<compile_context>
chip_gen: v5e
topology: v5e:2x2
jax: 0.10.0
libtpu: 0.0.40
codegen_flags: <defaults>
</compile_context>

<pallas_src>
import math
from functools import partial

import jax
import jax.numpy as jnp
from jax.experimental import pallas as pl
from jax.experimental.pallas import tpu as pltpu

_NEG_BIG = -1e30  # large finite negative (robust vs. -inf - -inf -> NaN)


def _pick_block(T, target=128):
    """Largest block <= target that divides T (multiple of 8 if possible)."""
    if T <= target:
        return T
    for b in range(target, 7, -8):
        if T % b == 0:
            return b
    return T


def _mhsa_flash_kernel(xq_ref, xkv_ref, wq_ref, wk_ref, wv_ref, o_ref,
                       q_scr, m_scr, l_scr, acc_scr, *,
                       scale, num_heads, head_dim, block_q, block_k):
    qi = pl.program_id(1)
    ki = pl.program_id(2)
    nk = pl.num_programs(2)

    q_start = qi * block_q
    k_start = ki * block_k

    # ---- init per Q tile: fused Q projection (all heads) + reset stats ----
    @pl.when(ki == 0)
    def _init():
        q = jnp.dot(xq_ref[0], wq_ref[...],
                    preferred_element_type=jnp.float32)            # (Tq, H*D)
        q_scr[...] = (q * scale).astype(q_scr.dtype)               # fold scale
        m_scr[...] = jnp.full(m_scr.shape, _NEG_BIG, dtype=m_scr.dtype)
        l_scr[...] = jnp.zeros(l_scr.shape, dtype=l_scr.dtype)
        acc_scr[...] = jnp.zeros(acc_scr.shape, dtype=acc_scr.dtype)

    # ---- causal block skipping: KV blocks fully above the diagonal do nothing
    @pl.when(k_start <= q_start + block_q - 1)
    def _compute():
        xk = xkv_ref[0]                                            # (Tk, C)
        # fused K / V projections (all heads wide, N = H*D)
        k = jnp.dot(xk, wk_ref[...],
                    preferred_element_type=jnp.float32).astype(xk.dtype)
        v = jnp.dot(xk, wv_ref[...],
                    preferred_element_type=jnp.float32).astype(xk.dtype)
        q = q_scr[...]                                             # (Tq, H*D)

        row = q_start + jax.lax.broadcasted_iota(jnp.int32, (block_q, block_k), 0)
        col = k_start + jax.lax.broadcasted_iota(jnp.int32, (block_q, block_k), 1)
        causal = col <= row

        for h in range(num_heads):                                 # static loop
            lo, hi = h * head_dim, (h + 1) * head_dim
            qh = q[:, lo:hi]                                       # (Tq, D)
            kh = k[:, lo:hi]                                       # (Tk, D)
            vh = v[:, lo:hi]                                       # (Tk, D)

            # 'td,sd->ts' contraction: no explicit K transpose.
            s = jax.lax.dot_general(
                qh, kh, (((1,), (1,)), ((), ())),
                preferred_element_type=jnp.float32)                # (Tq, Tk) f32
            s = jnp.where(causal, s, _NEG_BIG)

            m_prev = m_scr[:, h:h + 1]                             # (Tq, 1)
            m_new = jnp.maximum(m_prev, jnp.max(s, axis=-1, keepdims=True))
            alpha = jnp.exp(m_prev - m_new)
            p = jnp.exp(s - m_new)                                 # (Tq, Tk) f32
            l_scr[:, h:h + 1] = (alpha * l_scr[:, h:h + 1]
                                 + jnp.sum(p, axis=-1, keepdims=True))
            pv = jax.lax.dot_general(
                p.astype(vh.dtype), vh, (((1,), (0,)), ((), ())),
                preferred_element_type=jnp.float32)                # (Tq, D) f32
            acc_scr[:, lo:hi] = alpha * acc_scr[:, lo:hi] + pv
            m_scr[:, h:h + 1] = m_new

    # ---- finalize: normalize and write a lane-dense (Tq, H*D) output block --
    @pl.when(ki == nk - 1)
    def _finalize():
        parts = []
        for h in range(num_heads):
            lo, hi = h * head_dim, (h + 1) * head_dim
            inv = pl.reciprocal(l_scr[:, h:h + 1], approx=False)   # (Tq, 1)
            parts.append(acc_scr[:, lo:hi] * inv)
        o_ref[0] = jnp.concatenate(parts, axis=-1).astype(o_ref.dtype)


def multi_head_self_attention(x, wq, wk, wv, num_heads):
    """x: (B, T, C); wq/wk/wv: (C, H*D) with per-head columns concatenated.

    Returns (B, T, H*D) == torch.cat([head(x) for head in heads], dim=-1).
    Attention scores are scaled by 1/sqrt(C) (embedding_dim), as in the module.
    """
    B, T, C = x.shape
    HD = wq.shape[1]
    head_dim = HD // num_heads
    scale = 1.0 / math.sqrt(C)

    block_q = _pick_block(T, 128)
    block_k = _pick_block(T, 128)
    assert T % block_q == 0 and T % block_k == 0
    n_q = T // block_q
    n_k = T // block_k

    kernel = partial(_mhsa_flash_kernel, scale=scale, num_heads=num_heads,
                     head_dim=head_dim, block_q=block_q, block_k=block_k)

    itemsize = jnp.dtype(x.dtype).itemsize
    cost = pl.CostEstimate(
        flops=2 * B * T * C * 3 * HD + 2 * 2 * B * T * T * HD,
        transcendentals=B * num_heads * T * T,
        bytes_accessed=(2 * x.size + wq.size + wk.size + wv.size
                        + B * T * HD) * itemsize,
    )

    return pl.pallas_call(
        kernel,
        out_shape=jax.ShapeDtypeStruct((B, T, HD), x.dtype),
        grid_spec=pltpu.PrefetchScalarGridSpec(
            num_scalar_prefetch=0,
            grid=(B, n_q, n_k),
            in_specs=[
                pl.BlockSpec((1, block_q, C), lambda b, qi, ki: (b, qi, 0)),  # x rows for Q
                pl.BlockSpec((1, block_k, C), lambda b, qi, ki: (b, ki, 0)),  # x rows for K/V
                pl.BlockSpec((C, HD), lambda b, qi, ki: (0, 0)),              # Wq (loaded once)
                pl.BlockSpec((C, HD), lambda b, qi, ki: (0, 0)),              # Wk
                pl.BlockSpec((C, HD), lambda b, qi, ki: (0, 0)),              # Wv
            ],
            out_specs=pl.BlockSpec((1, block_q, HD), lambda b, qi, ki: (b, qi, 0)),
            scratch_shapes=[
                pltpu.VMEM((block_q, HD), x.dtype),             # Q tile (all heads)
                pltpu.VMEM((block_q, num_heads), jnp.float32),  # running max m
                pltpu.VMEM((block_q, num_heads), jnp.float32),  # running sum l
                pltpu.VMEM((block_q, HD), jnp.float32),         # output accumulator
            ],
        ),
        compiler_params=pltpu.CompilerParams(
            dimension_semantics=("parallel", "parallel", "arbitrary")),
        cost_estimate=cost,
    )(x, x, wq, wk, wv)


def _reference(x, wq_heads, wk_heads, wv_heads):
    """Pure-JAX reference mirroring the PyTorch module (per-head weights (H,C,D))."""
    B, T, C = x.shape
    H = wq_heads.shape[0]
    outs = []
    for h in range(H):
        Q = x @ wq_heads[h]
        K = x @ wk_heads[h]
        V = x @ wv_heads[h]
        s = (Q @ jnp.swapaxes(K, 1, 2)) / math.sqrt(C)
        row = jnp.arange(T)[:, None]
        col = jnp.arange(T)[None, :]
        s = jnp.where(col <= row, s, -jnp.inf)
        a = jax.nn.softmax(s, axis=-1)
        outs.append(a @ V)
    return jnp.concatenate(outs, axis=-1)


if __name__ == "__main__":
    B, T = 2, 8              # batch, sequence length (<= context_size)
    embedding_dim = 32
    num_heads = 4
    head_dim = embedding_dim // num_heads

    key = jax.random.PRNGKey(0)
    kx, kq, kk, kv = jax.random.split(key, 4)

    x = jax.random.normal(kx, (B, T, embedding_dim), dtype=jnp.float32)

    # nn.Linear(embedding_dim, head_dim, bias=False) -> per-head (C, D) weights,
    # generated stacked as (H, C, D) deterministically.
    bound = 1.0 / math.sqrt(embedding_dim)
    wq_h = jax.random.uniform(kq, (num_heads, embedding_dim, head_dim),
                              minval=-bound, maxval=bound, dtype=jnp.float32)
    wk_h = jax.random.uniform(kk, (num_heads, embedding_dim, head_dim),
                              minval=-bound, maxval=bound, dtype=jnp.float32)
    wv_h = jax.random.uniform(kv, (num_heads, embedding_dim, head_dim),
                              minval=-bound, maxval=bound, dtype=jnp.float32)

    # Fuse per-head weights column-wise: (H, C, D) -> (C, H*D).
    def stack(w):
        return jnp.transpose(w, (1, 0, 2)).reshape(embedding_dim,
                                                   num_heads * head_dim)

    wq, wk, wv = stack(wq_h), stack(wk_h), stack(wv_h)

    out = multi_head_self_attention(x, wq, wk, wv, num_heads)
    out = jax.block_until_ready(out)

    ref = _reference(x, wq_h, wk_h, wv_h)
    assert out.shape == (B, T, embedding_dim), out.shape
    assert jnp.allclose(out, ref, atol=1e-5, rtol=1e-5), "mismatch vs reference"

    print("KERNEL_OK")
</pallas_src>

<mosaic_0001>
module attributes {stable_mosaic.version = 11 : i64} {
  func.func @_mhsa_flash_kernel(%arg0: i32, %arg1: i32, %arg2: i32, %arg3: memref<1x8x32xf32, #tpu.memory_space<vmem>>, %arg4: memref<1x8x32xf32, #tpu.memory_space<vmem>>, %arg5: memref<32x32xf32, #tpu.memory_space<vmem>>, %arg6: memref<32x32xf32, #tpu.memory_space<vmem>>, %arg7: memref<32x32xf32, #tpu.memory_space<vmem>>, %arg8: memref<1x8x32xf32, #tpu.memory_space<vmem>>, %arg9: memref<8x32xf32, #tpu.memory_space<vmem>>, %arg10: memref<8x4xf32, #tpu.memory_space<vmem>>, %arg11: memref<8x4xf32, #tpu.memory_space<vmem>>, %arg12: memref<8x32xf32, #tpu.memory_space<vmem>>) attributes {dimension_semantics = [#tpu.dimension_semantics<parallel>, #tpu.dimension_semantics<parallel>, #tpu.dimension_semantics<arbitrary>], iteration_bounds = array<i64: 2, 1, 1>, scalar_prefetch = 0 : i64, scratch_operands = 4 : i64, tpu.core_type = #tpu.core_type<tc>, window_params = [{transform_indices = @transform_0, window_bounds = array<i64: 1, 8, 32>}, {transform_indices = @transform_1, window_bounds = array<i64: 1, 8, 32>}, {pipeline_mode = #tpu.pipeline_mode<synchronous>, transform_indices = @transform_2, window_bounds = array<i64: 32, 32>}, {pipeline_mode = #tpu.pipeline_mode<synchronous>, transform_indices = @transform_3, window_bounds = array<i64: 32, 32>}, {pipeline_mode = #tpu.pipeline_mode<synchronous>, transform_indices = @transform_4, window_bounds = array<i64: 32, 32>}, {transform_indices = @transform_5, window_bounds = array<i64: 1, 8, 32>}]} {
    %c8_i32 = arith.constant 8 : i32
    %0 = arith.muli %arg1, %c8_i32 : i32
    %c8_i32_0 = arith.constant 8 : i32
    %1 = arith.muli %arg2, %c8_i32_0 : i32
    %c0_i32 = arith.constant 0 : i32
    %2 = arith.cmpi eq, %arg2, %c0_i32 : i32
    %3 = arith.extui %2 : i1 to i32
    %c0_i32_1 = arith.constant 0 : i32
    %4 = arith.cmpi ne, %3, %c0_i32_1 : i32
    scf.if %4 {
      %c0 = arith.constant 0 : index
      %c0_6 = arith.constant 0 : index
      %c0_7 = arith.constant 0 : index
      %13 = vector.load %arg3[%c0, %c0_6, %c0_7] : memref<1x8x32xf32, #tpu.memory_space<vmem>>, vector<1x8x32xf32>
      %14 = vector.shape_cast %13 : vector<1x8x32xf32> to vector<8x32xf32>
      %c0_8 = arith.constant 0 : index
      %c0_9 = arith.constant 0 : index
      %15 = vector.load %arg5[%c0_8, %c0_9] : memref<32x32xf32, #tpu.memory_space<vmem>>, vector<32x32xf32>
      %cst = arith.constant dense<0.000000e+00> : vector<8x32xf32>
      %16 = tpu.matmul %14, %15, %cst {dimension_numbers = #tpu.dot_dimension_numbers<[1], [0], [0], [1], [0, 0, 1, 1], [], []>} : vector<8x32xf32>, vector<32x32xf32>, vector<8x32xf32> -> vector<8x32xf32>
      %cst_10 = arith.constant 0.176776692 : f32
      %17 = vector.broadcast %cst_10 : f32 to vector<8x32xf32>
      %18 = arith.mulf %16, %17 : vector<8x32xf32>
      %c0_11 = arith.constant 0 : index
      %c0_12 = arith.constant 0 : index
      %19 = vector.load %arg9[%c0_11, %c0_12] : memref<8x32xf32, #tpu.memory_space<vmem>>, vector<8x32xf32>
      tpu.vector_store %arg9[%c0_11, %c0_12], %18 {strides = array<i32>} : memref<8x32xf32, #tpu.memory_space<vmem>>, vector<8x32xf32>,
      %cst_13 = arith.constant -1.000000e+30 : f32
      %20 = vector.broadcast %cst_13 : f32 to vector<8x4xf32>
      %c0_14 = arith.constant 0 : index
      %c0_15 = arith.constant 0 : index
      %21 = vector.load %arg10[%c0_14, %c0_15] : memref<8x4xf32, #tpu.memory_space<vmem>>, vector<8x4xf32>
      tpu.vector_store %arg10[%c0_14, %c0_15], %20 {strides = array<i32>} : memref<8x4xf32, #tpu.memory_space<vmem>>, vector<8x4xf32>,
      %cst_16 = arith.constant 0.000000e+00 : f32
      %22 = vector.broadcast %cst_16 : f32 to vector<8x4xf32>
      %c0_17 = arith.constant 0 : index
      %c0_18 = arith.constant 0 : index
      %23 = vector.load %arg11[%c0_17, %c0_18] : memref<8x4xf32, #tpu.memory_space<vmem>>, vector<8x4xf32>
      tpu.vector_store %arg11[%c0_17, %c0_18], %22 {strides = array<i32>} : memref<8x4xf32, #tpu.memory_space<vmem>>, vector<8x4xf32>,
      %cst_19 = arith.constant 0.000000e+00 : f32
      %24 = vector.broadcast %cst_19 : f32 to vector<8x32xf32>
      %c0_20 = arith.constant 0 : index
      %c0_21 = arith.constant 0 : index
      %25 = vector.load %arg12[%c0_20, %c0_21] : memref<8x32xf32, #tpu.memory_space<vmem>>, vector<8x32xf32>
      tpu.vector_store %arg12[%c0_20, %c0_21], %24 {strides = array<i32>} : memref<8x32xf32, #tpu.memory_space<vmem>>, vector<8x32xf32>,
    } else {
    }
    %c8_i32_2 = arith.constant 8 : i32
    %5 = arith.addi %0, %c8_i32_2 : i32
    %c1_i32 = arith.constant 1 : i32
    %6 = arith.subi %5, %c1_i32 : i32
    %7 = arith.cmpi sle, %1, %6 : i32
    %8 = arith.extui %7 : i1 to i32
    %c0_i32_3 = arith.constant 0 : i32
    %9 = arith.cmpi ne, %8, %c0_i32_3 : i32
    scf.if %9 {
      %c0 = arith.constant 0 : index
      %c0_6 = arith.constant 0 : index
      %c0_7 = arith.constant 0 : index
      %13 = vector.load %arg4[%c0, %c0_6, %c0_7] : memref<1x8x32xf32, #tpu.memory_space<vmem>>, vector<1x8x32xf32>
      %14 = vector.shape_cast %13 : vector<1x8x32xf32> to vector<8x32xf32>
      %c0_8 = arith.constant 0 : index
      %c0_9 = arith.constant 0 : index
      %15 = vector.load %arg6[%c0_8, %c0_9] : memref<32x32xf32, #tpu.memory_space<vmem>>, vector<32x32xf32>
      %cst = arith.constant dense<0.000000e+00> : vector<8x32xf32>
      %16 = tpu.matmul %14, %15, %cst {dimension_numbers = #tpu.dot_dimension_numbers<[1], [0], [0], [1], [0, 0, 1, 1], [], []>} : vector<8x32xf32>, vector<32x32xf32>, vector<8x32xf32> -> vector<8x32xf32>
      %c0_10 = arith.constant 0 : index
      %c0_11 = arith.constant 0 : index
      %17 = vector.load %arg7[%c0_10, %c0_11] : memref<32x32xf32, #tpu.memory_space<vmem>>, vector<32x32xf32>
      %cst_12 = arith.constant dense<0.000000e+00> : vector<8x32xf32>
      %18 = tpu.matmul %14, %17, %cst_12 {dimension_numbers = #tpu.dot_dimension_numbers<[1], [0], [0], [1], [0, 0, 1, 1], [], []>} : vector<8x32xf32>, vector<32x32xf32>, vector<8x32xf32> -> vector<8x32xf32>
      %c0_13 = arith.constant 0 : index
      %c0_14 = arith.constant 0 : index
      %19 = vector.load %arg9[%c0_13, %c0_14] : memref<8x32xf32, #tpu.memory_space<vmem>>, vector<8x32xf32>
      %20 = tpu.iota {dimensions = array<i32: 0>} : vector<8x8xi32>
      %21 = vector.broadcast %0 : i32 to vector<8x8xi32>
      %22 = arith.addi %21, %20 : vector<8x8xi32>
      %23 = tpu.iota {dimensions = array<i32: 1>} : vector<8x8xi32>
      %24 = vector.broadcast %1 : i32 to vector<8x8xi32>
      %25 = arith.addi %24, %23 : vector<8x8xi32>
      %26 = arith.cmpi sle, %25, %22 : vector<8x8xi32>
      %27 = vector.extract_strided_slice %19 {offsets = [0, 0], sizes = [8, 8], strides = [1, 1]} : vector<8x32xf32> to vector<8x8xf32>
      %28 = vector.extract_strided_slice %16 {offsets = [0, 0], sizes = [8, 8], strides = [1, 1]} : vector<8x32xf32> to vector<8x8xf32>
      %29 = vector.extract_strided_slice %18 {offsets = [0, 0], sizes = [8, 8], strides = [1, 1]} : vector<8x32xf32> to vector<8x8xf32>
      %cst_15 = arith.constant dense<0.000000e+00> : vector<8x8xf32>
      %30 = tpu.matmul %27, %28, %cst_15 {dimension_numbers = #tpu.dot_dimension_numbers<[1], [1], [0], [0], [0, 0, 1, 0], [], []>} : vector<8x8xf32>, vector<8x8xf32>, vector<8x8xf32> -> vector<8x8xf32>
      %cst_16 = arith.constant -1.000000e+30 : f32
      %31 = vector.broadcast %cst_16 : f32 to vector<8x8xf32>
      %32 = arith.select %26, %30, %31 : vector<8x8xi1>, vector<8x8xf32>
      %c0_17 = arith.constant 0 : index
      %c0_18 = arith.constant 0 : index
      %33 = vector.load %arg10[%c0_17, %c0_18] : memref<8x4xf32, #tpu.memory_space<vmem>>, vector<8x1xf32>
      %cst_19 = arith.constant dense<0xFF800000> : vector<8xf32>
      %34 = vector.multi_reduction <maximumf>, %32, %cst_19 [1] : vector<8x8xf32> to vector<8xf32>
      %35 = vector.shape_cast %34 : vector<8xf32> to vector<8x1xf32>
      %36 = arith.maximumf %33, %35 : vector<8x1xf32>
      %37 = arith.subf %33, %36 : vector<8x1xf32>
      %38 = math.exp %37 : vector<8x1xf32>
      %39 = vector.broadcast %36 : vector<8x1xf32> to vector<8x8xf32>
      %40 = arith.subf %32, %39 : vector<8x8xf32>
      %41 = math.exp %40 : vector<8x8xf32>
      %c0_20 = arith.constant 0 : index
      %c0_21 = arith.constant 0 : index
      %42 = vector.load %arg11[%c0_20, %c0_21] : memref<8x4xf32, #tpu.memory_space<vmem>>, vector<8x1xf32>
      %43 = arith.mulf %38, %42 : vector<8x1xf32>
      %cst_22 = arith.constant dense<0.000000e+00> : vector<8xf32>
      %44 = vector.multi_reduction <add>, %41, %cst_22 [1] : vector<8x8xf32> to vector<8xf32>
      %45 = vector.shape_cast %44 : vector<8xf32> to vector<8x1xf32>
      %46 = arith.addf %43, %45 : vector<8x1xf32>
      %c0_23 = arith.constant 0 : index
      %c0_24 = arith.constant 0 : index
      %47 = vector.load %arg11[%c0_23, %c0_24] : memref<8x4xf32, #tpu.memory_space<vmem>>, vector<8x1xf32>
      tpu.vector_store %arg11[%c0_23, %c0_24], %46 {strides = array<i32>} : memref<8x4xf32, #tpu.memory_space<vmem>>, vector<8x1xf32>,
      %cst_25 = arith.constant dense<0.000000e+00> : vector<8x8xf32>
      %48 = tpu.matmul %41, %29, %cst_25 {dimension_numbers = #tpu.dot_dimension_numbers<[1], [0], [0], [1], [0, 0, 1, 1], [], []>} : vector<8x8xf32>, vector<8x8xf32>, vector<8x8xf32> -> vector<8x8xf32>
      %c0_26 = arith.constant 0 : index
      %c0_27 = arith.constant 0 : index
      %49 = vector.load %arg12[%c0_26, %c0_27] : memref<8x32xf32, #tpu.memory_space<vmem>>, vector<8x8xf32>
      %50 = vector.broadcast %38 : vector<8x1xf32> to vector<8x8xf32>
      %51 = arith.mulf %50, %49 : vector<8x8xf32>
      %52 = arith.addf %51, %48 : vector<8x8xf32>
      %c0_28 = arith.constant 0 : index
      %c0_29 = arith.constant 0 : index
      %53 = vector.load %arg12[%c0_28, %c0_29] : memref<8x32xf32, #tpu.memory_space<vmem>>, vector<8x8xf32>
      tpu.vector_store %arg12[%c0_28, %c0_29], %52 {strides = array<i32>} : memref<8x32xf32, #tpu.memory_space<vmem>>, vector<8x8xf32>,
      %c0_30 = arith.constant 0 : index
      %c0_31 = arith.constant 0 : index
      %54 = vector.load %arg10[%c0_30, %c0_31] : memref<8x4xf32, #tpu.memory_space<vmem>>, vector<8x1xf32>
      tpu.vector_store %arg10[%c0_30, %c0_31], %36 {strides = array<i32>} : memref<8x4xf32, #tpu.memory_space<vmem>>, vector<8x1xf32>,
      %55 = vector.extract_strided_slice %19 {offsets = [0, 8], sizes = [8, 8], strides = [1, 1]} : vector<8x32xf32> to vector<8x8xf32>
      %56 = vector.extract_strided_slice %16 {offsets = [0, 8], sizes = [8, 8], strides = [1, 1]} : vector<8x32xf32> to vector<8x8xf32>
      %57 = vector.extract_strided_slice %18 {offsets = [0, 8], sizes = [8, 8], strides = [1, 1]} : vector<8x32xf32> to vector<8x8xf32>
      %cst_32 = arith.constant dense<0.000000e+00> : vector<8x8xf32>
      %58 = tpu.matmul %55, %56, %cst_32 {dimension_numbers = #tpu.dot_dimension_numbers<[1], [1], [0], [0], [0, 0, 1, 0], [], []>} : vector<8x8xf32>, vector<8x8xf32>, vector<8x8xf32> -> vector<8x8xf32>
      %cst_33 = arith.constant -1.000000e+30 : f32
      %59 = vector.broadcast %cst_33 : f32 to vector<8x8xf32>
      %60 = arith.select %26, %58, %59 : vector<8x8xi1>, vector<8x8xf32>
      %c0_34 = arith.constant 0 : index
      %c1 = arith.constant 1 : index
      %61 = vector.load %arg10[%c0_34, %c1] : memref<8x4xf32, #tpu.memory_space<vmem>>, vector<8x1xf32>
      %cst_35 = arith.constant dense<0xFF800000> : vector<8xf32>
      %62 = vector.multi_reduction <maximumf>, %60, %cst_35 [1] : vector<8x8xf32> to vector<8xf32>
      %63 = vector.shape_cast %62 : vector<8xf32> to vector<8x1xf32>
      %64 = arith.maximumf %61, %63 : vector<8x1xf32>
      %65 = arith.subf %61, %64 : vector<8x1xf32>
      %66 = math.exp %65 : vector<8x1xf32>
      %67 = vector.broadcast %64 : vector<8x1xf32> to vector<8x8xf32>
      %68 = arith.subf %60, %67 : vector<8x8xf32>
      %69 = math.exp %68 : vector<8x8xf32>
      %c0_36 = arith.constant 0 : index
      %c1_37 = arith.constant 1 : index
      %70 = vector.load %arg11[%c0_36, %c1_37] : memref<8x4xf32, #tpu.memory_space<vmem>>, vector<8x1xf32>
      %71 = arith.mulf %66, %70 : vector<8x1xf32>
      %cst_38 = arith.constant dense<0.000000e+00> : vector<8xf32>
      %72 = vector.multi_reduction <add>, %69, %cst_38 [1] : vector<8x8xf32> to vector<8xf32>
      %73 = vector.shape_cast %72 : vector<8xf32> to vector<8x1xf32>
      %74 = arith.addf %71, %73 : vector<8x1xf32>
      %c0_39 = arith.constant 0 : index
      %c1_40 = arith.constant 1 : index
      %75 = vector.load %arg11[%c0_39, %c1_40] : memref<8x4xf32, #tpu.memory_space<vmem>>, vector<8x1xf32>
      tpu.vector_store %arg11[%c0_39, %c1_40], %74 {strides = array<i32>} : memref<8x4xf32, #tpu.memory_space<vmem>>, vector<8x1xf32>,
      %cst_41 = arith.constant dense<0.000000e+00> : vector<8x8xf32>
      %76 = tpu.matmul %69, %57, %cst_41 {dimension_numbers = #tpu.dot_dimension_numbers<[1], [0], [0], [1], [0, 0, 1, 1], [], []>} : vector<8x8xf32>, vector<8x8xf32>, vector<8x8xf32> -> vector<8x8xf32>
      %c0_42 = arith.constant 0 : index
      %c8 = arith.constant 8 : index
      %77 = vector.load %arg12[%c0_42, %c8] : memref<8x32xf32, #tpu.memory_space<vmem>>, vector<8x8xf32>
      %78 = vector.broadcast %66 : vector<8x1xf32> to vector<8x8xf32>
      %79 = arith.mulf %78, %77 : vector<8x8xf32>
      %80 = arith.addf %79, %76 : vector<8x8xf32>
      %c0_43 = arith.constant 0 : index
      %c8_44 = arith.constant 8 : index
      %81 = vector.load %arg12[%c0_43, %c8_44] : memref<8x32xf32, #tpu.memory_space<vmem>>, vector<8x8xf32>
      tpu.vector_store %arg12[%c0_43, %c8_44], %80 {strides = array<i32>} : memref<8x32xf32, #tpu.memory_space<vmem>>, vector<8x8xf32>,
      %c0_45 = arith.constant 0 : index
      %c1_46 = arith.constant 1 : index
      %82 = vector.load %arg10[%c0_45, %c1_46] : memref<8x4xf32, #tpu.memory_space<vmem>>, vector<8x1xf32>
      tpu.vector_store %arg10[%c0_45, %c1_46], %64 {strides = array<i32>} : memref<8x4xf32, #tpu.memory_space<vmem>>, vector<8x1xf32>,
      %83 = vector.extract_strided_slice %19 {offsets = [0, 16], sizes = [8, 8], strides = [1, 1]} : vector<8x32xf32> to vector<8x8xf32>
      %84 = vector.extract_strided_slice %16 {offsets = [0, 16], sizes = [8, 8], strides = [1, 1]} : vector<8x32xf32> to vector<8x8xf32>
      %85 = vector.extract_strided_slice %18 {offsets = [0, 16], sizes = [8, 8], strides = [1, 1]} : vector<8x32xf32> to vector<8x8xf32>
      %cst_47 = arith.constant dense<0.000000e+00> : vector<8x8xf32>
      %86 = tpu.matmul %83, %84, %cst_47 {dimension_numbers = #tpu.dot_dimension_numbers<[1], [1], [0], [0], [0, 0, 1, 0], [], []>} : vector<8x8xf32>, vector<8x8xf32>, vector<8x8xf32> -> vector<8x8xf32>
      %cst_48 = arith.constant -1.000000e+30 : f32
      %87 = vector.broadcast %cst_48 : f32 to vector<8x8xf32>
      %88 = arith.select %26, %86, %87 : vector<8x8xi1>, vector<8x8xf32>
      %c0_49 = arith.constant 0 : index
      %c2 = arith.constant 2 : index
      %89 = vector.load %arg10[%c0_49, %c2] : memref<8x4xf32, #tpu.memory_space<vmem>>, vector<8x1xf32>
      %cst_50 = arith.constant dense<0xFF800000> : vector<8xf32>
      %90 = vector.multi_reduction <maximumf>, %88, %cst_50 [1] : vector<8x8xf32> to vector<8xf32>
      %91 = vector.shape_cast %90 : vector<8xf32> to vector<8x1xf32>
      %92 = arith.maximumf %89, %91 : vector<8x1xf32>
      %93 = arith.subf %89, %92 : vector<8x1xf32>
      %94 = math.exp %93 : vector<8x1xf32>
      %95 = vector.broadcast %92 : vector<8x1xf32> to vector<8x8xf32>
      %96 = arith.subf %88, %95 : vector<8x8xf32>
      %97 = math.exp %96 : vector<8x8xf32>
      %c0_51 = arith.constant 0 : index
      %c2_52 = arith.constant 2 : index
      %98 = vector.load %arg11[%c0_51, %c2_52] : memref<8x4xf32, #tpu.memory_space<vmem>>, vector<8x1xf32>
      %99 = arith.mulf %94, %98 : vector<8x1xf32>
      %cst_53 = arith.constant dense<0.000000e+00> : vector<8xf32>
      %100 = vector.multi_reduction <add>, %97, %cst_53 [1] : vector<8x8xf32> to vector<8xf32>
      %101 = vector.shape_cast %100 : vector<8xf32> to vector<8x1xf32>
      %102 = arith.addf %99, %101 : vector<8x1xf32>
      %c0_54 = arith.constant 0 : index
      %c2_55 = arith.constant 2 : index
      %103 = vector.load %arg11[%c0_54, %c2_55] : memref<8x4xf32, #tpu.memory_space<vmem>>, vector<8x1xf32>
      tpu.vector_store %arg11[%c0_54, %c2_55], %102 {strides = array<i32>} : memref<8x4xf32, #tpu.memory_space<vmem>>, vector<8x1xf32>,
      %cst_56 = arith.constant dense<0.000000e+00> : vector<8x8xf32>
      %104 = tpu.matmul %97, %85, %cst_56 {dimension_numbers = #tpu.dot_dimension_numbers<[1], [0], [0], [1], [0, 0, 1, 1], [], []>} : vector<8x8xf32>, vector<8x8xf32>, vector<8x8xf32> -> vector<8x8xf32>
      %c0_57 = arith.constant 0 : index
      %c16 = arith.constant 16 : index
      %105 = vector.load %arg12[%c0_57, %c16] : memref<8x32xf32, #tpu.memory_space<vmem>>, vector<8x8xf32>
      %106 = vector.broadcast %94 : vector<8x1xf32> to vector<8x8xf32>
      %107 = arith.mulf %106, %105 : vector<8x8xf32>
      %108 = arith.addf %107, %104 : vector<8x8xf32>
      %c0_58 = arith.constant 0 : index
      %c16_59 = arith.constant 16 : index
      %109 = vector.load %arg12[%c0_58, %c16_59] : memref<8x32xf32, #tpu.memory_space<vmem>>, vector<8x8xf32>
      tpu.vector_store %arg12[%c0_58, %c16_59], %108 {strides = array<i32>} : memref<8x32xf32, #tpu.memory_space<vmem>>, vector<8x8xf32>,
      %c0_60 = arith.constant 0 : index
      %c2_61 = arith.constant 2 : index
      %110 = vector.load %arg10[%c0_60, %c2_61] : memref<8x4xf32, #tpu.memory_space<vmem>>, vector<8x1xf32>
      tpu.vector_store %arg10[%c0_60, %c2_61], %92 {strides = array<i32>} : memref<8x4xf32, #tpu.memory_space<vmem>>, vector<8x1xf32>,
      %111 = vector.extract_strided_slice %19 {offsets = [0, 24], sizes = [8, 8], strides = [1, 1]} : vector<8x32xf32> to vector<8x8xf32>
      %112 = vector.extract_strided_slice %16 {offsets = [0, 24], sizes = [8, 8], strides = [1, 1]} : vector<8x32xf32> to vector<8x8xf32>
      %113 = vector.extract_strided_slice %18 {offsets = [0, 24], sizes = [8, 8], strides = [1, 1]} : vector<8x32xf32> to vector<8x8xf32>
      %cst_62 = arith.constant dense<0.000000e+00> : vector<8x8xf32>
      %114 = tpu.matmul %111, %112, %cst_62 {dimension_numbers = #tpu.dot_dimension_numbers<[1], [1], [0], [0], [0, 0, 1, 0], [], []>} : vector<8x8xf32>, vector<8x8xf32>, vector<8x8xf32> -> vector<8x8xf32>
      %cst_63 = arith.constant -1.000000e+30 : f32
      %115 = vector.broadcast %cst_63 : f32 to vector<8x8xf32>
      %116 = arith.select %26, %114, %115 : vector<8x8xi1>, vector<8x8xf32>
      %c0_64 = arith.constant 0 : index
      %c3 = arith.constant 3 : index
      %117 = vector.load %arg10[%c0_64, %c3] : memref<8x4xf32, #tpu.memory_space<vmem>>, vector<8x1xf32>
      %cst_65 = arith.constant dense<0xFF800000> : vector<8xf32>
      %118 = vector.multi_reduction <maximumf>, %116, %cst_65 [1] : vector<8x8xf32> to vector<8xf32>
      %119 = vector.shape_cast %118 : vector<8xf32> to vector<8x1xf32>
      %120 = arith.maximumf %117, %119 : vector<8x1xf32>
      %121 = arith.subf %117, %120 : vector<8x1xf32>
      %122 = math.exp %121 : vector<8x1xf32>
      %123 = vector.broadcast %120 : vector<8x1xf32> to vector<8x8xf32>
      %124 = arith.subf %116, %123 : vector<8x8xf32>
      %125 = math.exp %124 : vector<8x8xf32>
      %c0_66 = arith.constant 0 : index
      %c3_67 = arith.constant 3 : index
      %126 = vector.load %arg11[%c0_66, %c3_67] : memref<8x4xf32, #tpu.memory_space<vmem>>, vector<8x1xf32>
      %127 = arith.mulf %122, %126 : vector<8x1xf32>
      %cst_68 = arith.constant dense<0.000000e+00> : vector<8xf32>
      %128 = vector.multi_reduction <add>, %125, %cst_68 [1] : vector<8x8xf32> to vector<8xf32>
      %129 = vector.shape_cast %128 : vector<8xf32> to vector<8x1xf32>
      %130 = arith.addf %127, %129 : vector<8x1xf32>
      %c0_69 = arith.constant 0 : index
      %c3_70 = arith.constant 3 : index
      %131 = vector.load %arg11[%c0_69, %c3_70] : memref<8x4xf32, #tpu.memory_space<vmem>>, vector<8x1xf32>
      tpu.vector_store %arg11[%c0_69, %c3_70], %130 {strides = array<i32>} : memref<8x4xf32, #tpu.memory_space<vmem>>, vector<8x1xf32>,
      %cst_71 = arith.constant dense<0.000000e+00> : vector<8x8xf32>
      %132 = tpu.matmul %125, %113, %cst_71 {dimension_numbers = #tpu.dot_dimension_numbers<[1], [0], [0], [1], [0, 0, 1, 1], [], []>} : vector<8x8xf32>, vector<8x8xf32>, vector<8x8xf32> -> vector<8x8xf32>
      %c0_72 = arith.constant 0 : index
      %c24 = arith.constant 24 : index
      %133 = vector.load %arg12[%c0_72, %c24] : memref<8x32xf32, #tpu.memory_space<vmem>>, vector<8x8xf32>
      %134 = vector.broadcast %122 : vector<8x1xf32> to vector<8x8xf32>
      %135 = arith.mulf %134, %133 : vector<8x8xf32>
      %136 = arith.addf %135, %132 : vector<8x8xf32>
      %c0_73 = arith.constant 0 : index
      %c24_74 = arith.constant 24 : index
      %137 = vector.load %arg12[%c0_73, %c24_74] : memref<8x32xf32, #tpu.memory_space<vmem>>, vector<8x8xf32>
      tpu.vector_store %arg12[%c0_73, %c24_74], %136 {strides = array<i32>} : memref<8x32xf32, #tpu.memory_space<vmem>>, vector<8x8xf32>,
      %c0_75 = arith.constant 0 : index
      %c3_76 = arith.constant 3 : index
      %138 = vector.load %arg10[%c0_75, %c3_76] : memref<8x4xf32, #tpu.memory_space<vmem>>, vector<8x1xf32>
      tpu.vector_store %arg10[%c0_75, %c3_76], %120 {strides = array<i32>} : memref<8x4xf32, #tpu.memory_space<vmem>>, vector<8x1xf32>,
    } else {
    }
    %c0_i32_4 = arith.constant 0 : i32
    %10 = arith.cmpi eq, %arg2, %c0_i32_4 : i32
    %11 = arith.extui %10 : i1 to i32
    %c0_i32_5 = arith.constant 0 : i32
    %12 = arith.cmpi ne, %11, %c0_i32_5 : i32
    scf.if %12 {
      %c0 = arith.constant 0 : index
      %c0_6 = arith.constant 0 : index
      %13 = vector.load %arg11[%c0, %c0_6] : memref<8x4xf32, #tpu.memory_space<vmem>>, vector<8x1xf32>
      %14 = tpu.reciprocal %13 : vector<8x1xf32> -> vector<8x1xf32>
      %c0_7 = arith.constant 0 : index
      %c0_8 = arith.constant 0 : index
      %15 = vector.load %arg12[%c0_7, %c0_8] : memref<8x32xf32, #tpu.memory_space<vmem>>, vector<8x8xf32>
      %16 = vector.broadcast %14 : vector<8x1xf32> to vector<8x8xf32>
      %17 = arith.mulf %15, %16 : vector<8x8xf32>
      %c0_9 = arith.constant 0 : index
      %c1 = arith.constant 1 : index
      %18 = vector.load %arg11[%c0_9, %c1] : memref<8x4xf32, #tpu.memory_space<vmem>>, vector<8x1xf32>
      %19 = tpu.reciprocal %18 : vector<8x1xf32> -> vector<8x1xf32>
      %c0_10 = arith.constant 0 : index
      %c8 = arith.constant 8 : index
      %20 = vector.load %arg12[%c0_10, %c8] : memref<8x32xf32, #tpu.memory_space<vmem>>, vector<8x8xf32>
      %21 = vector.broadcast %19 : vector<8x1xf32> to vector<8x8xf32>
      %22 = arith.mulf %20, %21 : vector<8x8xf32>
      %c0_11 = arith.constant 0 : index
      %c2 = arith.constant 2 : index
      %23 = vector.load %arg11[%c0_11, %c2] : memref<8x4xf32, #tpu.memory_space<vmem>>, vector<8x1xf32>
      %24 = tpu.reciprocal %23 : vector<8x1xf32> -> vector<8x1xf32>
      %c0_12 = arith.constant 0 : index
      %c16 = arith.constant 16 : index
      %25 = vector.load %arg12[%c0_12, %c16] : memref<8x32xf32, #tpu.memory_space<vmem>>, vector<8x8xf32>
      %26 = vector.broadcast %24 : vector<8x1xf32> to vector<8x8xf32>
      %27 = arith.mulf %25, %26 : vector<8x8xf32>
      %c0_13 = arith.constant 0 : index
      %c3 = arith.constant 3 : index
      %28 = vector.load %arg11[%c0_13, %c3] : memref<8x4xf32, #tpu.memory_space<vmem>>, vector<8x1xf32>
      %29 = tpu.reciprocal %28 : vector<8x1xf32> -> vector<8x1xf32>
      %c0_14 = arith.constant 0 : index
      %c24 = arith.constant 24 : index
      %30 = vector.load %arg12[%c0_14, %c24] : memref<8x32xf32, #tpu.memory_space<vmem>>, vector<8x8xf32>
      %31 = vector.broadcast %29 : vector<8x1xf32> to vector<8x8xf32>
      %32 = arith.mulf %30, %31 : vector<8x8xf32>
      %33 = tpu.concatenate %17, %22, %27, %32 in 1 : vector<8x8xf32>, vector<8x8xf32>, vector<8x8xf32>, vector<8x8xf32> -> vector<8x32xf32>
      %c0_15 = arith.constant 0 : index
      %c0_16 = arith.constant 0 : index
      %c0_17 = arith.constant 0 : index
      %34 = vector.load %arg8[%c0_15, %c0_16, %c0_17] : memref<1x8x32xf32, #tpu.memory_space<vmem>>, vector<1x8x32xf32>
      %35 = vector.shape_cast %34 : vector<1x8x32xf32> to vector<8x32xf32>
      %36 = vector.shape_cast %33 : vector<8x32xf32> to vector<1x8x32xf32>
      tpu.vector_store %arg8[%c0_15, %c0_16, %c0_17], %36 {strides = array<i32>} : memref<1x8x32xf32, #tpu.memory_space<vmem>>, vector<1x8x32xf32>,
    } else {
    }
    return
  }
  func.func @transform_0(%arg0: i32, %arg1: i32, %arg2: i32) -> (i32, i32, i32) {
    %c0_i32 = arith.constant 0 : i32
    %c0_i32_0 = arith.constant 0 : i32
    return %arg0, %arg1, %c0_i32 : i32, i32, i32
  }
  func.func @transform_1(%arg0: i32, %arg1: i32, %arg2: i32) -> (i32, i32, i32) {
    %c0_i32 = arith.constant 0 : i32
    %c0_i32_0 = arith.constant 0 : i32
    return %arg0, %arg2, %c0_i32 : i32, i32, i32
  }
  func.func @transform_2(%arg0: i32, %arg1: i32, %arg2: i32) -> (i32, i32) {
    %c0_i32 = arith.constant 0 : i32
    %c0_i32_0 = arith.constant 0 : i32
    %c0_i32_1 = arith.constant 0 : i32
    return %c0_i32, %c0_i32_0 : i32, i32
  }
  func.func @transform_3(%arg0: i32, %arg1: i32, %arg2: i32) -> (i32, i32) {
    %c0_i32 = arith.constant 0 : i32
    %c0_i32_0 = arith.constant 0 : i32
    %c0_i32_1 = arith.constant 0 : i32
    return %c0_i32, %c0_i32_0 : i32, i32
  }
  func.func @transform_4(%arg0: i32, %arg1: i32, %arg2: i32) -> (i32, i32) {
    %c0_i32 = arith.constant 0 : i32
    %c0_i32_0 = arith.constant 0 : i32
    %c0_i32_1 = arith.constant 0 : i32
    return %c0_i32, %c0_i32_0 : i32, i32
  }
  func.func @transform_5(%arg0: i32, %arg1: i32, %arg2: i32) -> (i32, i32, i32) {
    %c0_i32 = arith.constant 0 : i32
    %c0_i32_0 = arith.constant 0 : i32
    return %arg0, %arg1, %c0_i32 : i32, i32, i32
  }
}

</mosaic_0001>

<llo_original>
// kernel: tpu_custom_call.1
$region0: #{tpu_custom_call.1}
  #allocation0 [shape = 'u32[]', space=smem, size = 0x4, offset = 0x4, fixed_abs, tag = 'smem constant byte address 0x4 - core index']
  #allocation1 [shape = 'u32[72,128]{1,0:T(1,128)}', space=vmem, size = 0x9000, scoped, tag = 'internal scratch']
  #allocation2 [shape = 'f32[8,32]{1,0:T(8,128)}', space=vmem, size = 0x1000, scoped, tag = 'scratch operand']
  #allocation3 [shape = 'f32[8,4]{1,0:T(8,128)}', space=vmem, size = 0x1000, scoped, tag = 'scratch operand']
  #allocation4 [shape = 'f32[8,4]{1,0:T(8,128)}', space=vmem, size = 0x1000, scoped, tag = 'scratch operand']
  #allocation5 [shape = 'f32[8,32]{1,0:T(8,128)}', space=vmem, size = 0x1000, scoped, tag = 'scratch operand']
  %s0 = inlined_call_operand.hbm [shape: f32[2,8,32], index: 0, kind: input, shape index: {}]
  %s1 = inlined_call_operand.hbm [shape: f32[2,8,32], index: 1, kind: input, shape index: {}]
  %s2 = inlined_call_operand.hbm [shape: f32[32,32], index: 2, kind: input, shape index: {}]
  %s3 = inlined_call_operand.hbm [shape: f32[32,32], index: 3, kind: input, shape index: {}]
  %s4 = inlined_call_operand.hbm [shape: f32[32,32], index: 4, kind: input, shape index: {}]
  %s5 = inlined_call_operand.hbm [shape: f32[2,8,32], index: 5, kind: output, shape index: {}]
  %s6 = sld [smem:[#allocation0]]
  $region85: #{tpu_custom_call.1} parent=0
    _
  %s8 = ssub.s32 1, %s6
  %s9 = scalar_select 0, %s8, %s6
  $region1: #{tpu_custom_call.1} parent=0
    #allocation6 [shape = 'u8[8192]{0}', space=vmem, size = 0x2000, scoped, tag = 'input window, operand 0']
    #allocation7 [shape = 's32[2]{0}', space=sflag, size = 0x8, scoped, tag = 'scoped memory for tpu_custom_call.1']
    #allocation8 [shape = 's32[2]{0}', space=sflag, size = 0x8, scoped, tag = 'scoped memory for tpu_custom_call.1']
    #allocation9 [shape = 'u8[8192]{0}', space=vmem, size = 0x2000, scoped, tag = 'input window, operand 1']
    #allocation10 [shape = 's32[2]{0}', space=sflag, size = 0x8, scoped, tag = 'scoped memory for tpu_custom_call.1']
    #allocation11 [shape = 'u8[16384]{0}', space=vmem, size = 0x4000, scoped, tag = 'input window, operand 2, single buffered']
    #allocation12 [shape = 'u8[16384]{0}', space=vmem, size = 0x4000, scoped, tag = 'input window, operand 3, single buffered']
    #allocation13 [shape = 's32[1]{0}', space=sflag, size = 0x4, scoped, tag = 'scoped memory for tpu_custom_call.1']
    #allocation14 [shape = 'u8[16384]{0}', space=vmem, size = 0x4000, scoped, tag = 'input window, operand 4, single buffered']
    #allocation15 [shape = 'u8[8192]{0}', space=vmem, size = 0x2000, scoped, tag = 'output window, operand 0']
    %10 = vsyncpa [#allocation7], 0
    %s11 = scalar_lea.sflag [#allocation7], 1
    %12 = vsyncpa %s11, 0
    %13 = vsyncpa [#allocation10], 0
    %s14 = scalar_lea.sflag [#allocation10], 1
    %15 = vsyncpa %s14, 0
    %16 = vsyncpa [#allocation13], 0
    %17 = vsyncpa [#allocation8], 0
    %s18 = scalar_lea.sflag [#allocation8], 1
    %19 = vsyncpa %s18, 0
    loop: start=0, step=1, limit=4
    $region2: #{tpu_custom_call.1} parent=1 // loop_pre_header
      _
    $region3: #{tpu_custom_call.1} parent=1 // loop_header
      %s21 = sphi 0, %s25
      %p22 = scmp.ge.s32.totalorder %s21, 4
      %s28 = sphi 0, %s47
      %s29 = sphi 0, %s43
      %s30 = sphi 0, %s39
      %s31 = sphi 0, %s28
      %s32 = sphi 0, %s29
      %s33 = sphi 0, %s30
      %s34 = sphi 0, %s31
      %s35 = sphi 0, %s32
      %s36 = sphi 0, %s33
      %s52 = sphi 0, %s54
      %s55 = sphi 0, %s52
      %s56 = sphi 0, %s55
      %s72 = sphi 0, %s56
      %s80 = sphi 0, %s82
      %s83 = sphi 0, %s80
      %s84 = sphi 0, %s83
      %s100 = sphi 0, %s84
      %s104 = sphi 0, %s104
      %s106 = sphi 0, %s104
      %s107 = sphi 0, %s106
      %s121 = sphi 0, %s107
      %s125 = sphi 0, %s125
      %s127 = sphi 0, %s125
      %s128 = sphi 0, %s127
      %s142 = sphi 0, %s128
      %s146 = sphi 0, %s146
      %s148 = sphi 0, %s146
      %s149 = sphi 0, %s148
      %s163 = sphi 0, %s149
      %s171 = sphi 0, %s173
      %s174 = sphi 0, %s171
      %s175 = sphi 0, %s174
      %s191 = sphi 0, %s175
    $region4: #{tpu_custom_call.1} parent=1 // loop_header_branch
      %24 = sbr.rel (%p22) target = $region8
    $region5: #{tpu_custom_call.1} parent=1 // loop_body
      %s26 = ssub.s32 %s21, 1
      %s27 = ssub.s32 %s21, 2
      %s37 = sadd.s32 1, %s30
      %p38 = scmp.ge.s32.totalorder %s37, 1
      %s39 = scalar_select %p38, 0, %s37
      %s40 = sadd.s32 1, %s29
      %s41 = scalar_select %p38, %s40, %s29
      %p42 = scmp.ge.s32.totalorder %s41, 1
      %s43 = scalar_select %p42, 0, %s41
      %s44 = sadd.s32 1, %s28
      %s45 = scalar_select %p42, %s44, %s28
      %p46 = scmp.ge.s32.totalorder %s45, 2
      %s47 = scalar_select %p46, 0, %s45
      %s48 = ssub.s32 %s28, %s47
      %s49 = ssub.s32 %s29, %s43
      %s50 = sor.u32 %s48, %s49
      %p51 = scmp.eq.s32.totalorder %s50, 0
      %s53 = sadd.s32 %s52, 1
      %s54 = scalar_select %p51, %s52, %s53
      %p57 = pneg %p51
      %p58 = scmp.eq.s32.totalorder %s21, 1
      %p59 = por %p57, %p58
      %p60 = scmp.ne.s32.totalorder %s52, %s55
      %p61 = scmp.eq.s32.totalorder %s21, 0
      %p62 = por %p60, %p61
      %p63 = scmp.ne.s32.totalorder %s52, %s55
      %p64 = scmp.eq.s32.totalorder %s26, 1
      %p65 = por %p63, %p64
      %p66 = scmp.ne.s32.totalorder %s55, %s56
      %p67 = scmp.eq.s32.totalorder %s26, 0
      %p68 = por %p66, %p67
      %p69 = scmp.ne.s32.totalorder %s55, %s56
      %p70 = scmp.eq.s32.totalorder %s27, 1
      %p71 = por %p69, %p70
      %p73 = scmp.ne.s32.totalorder %s56, %s72
      %p74 = scmp.eq.s32.totalorder %s27, 0
      %p75 = por %p73, %p74
      %s76 = ssub.s32 %s28, %s47
      %s77 = ssub.s32 %s30, %s39
      %s78 = sor.u32 %s76, %s77
      %p79 = scmp.eq.s32.totalorder %s78, 0
      %s81 = sadd.s32 %s80, 1
      %s82 = scalar_select %p79, %s80, %s81
      %p85 = pneg %p79
      %p86 = scmp.eq.s32.totalorder %s21, 1
      %p87 = por %p85, %p86
      %p88 = scmp.ne.s32.totalorder %s80, %s83
      %p89 = scmp.eq.s32.totalorder %s21, 0
      %p90 = por %p88, %p89
      %p91 = scmp.ne.s32.totalorder %s80, %s83
      %p92 = scmp.eq.s32.totalorder %s26, 1
      %p93 = por %p91, %p92
      %p94 = scmp.ne.s32.totalorder %s83, %s84
      %p95 = scmp.eq.s32.totalorder %s26, 0
      %p96 = por %p94, %p95
      %p97 = scmp.ne.s32.totalorder %s83, %s84
      %p98 = scmp.eq.s32.totalorder %s27, 1
      %p99 = por %p97, %p98
      %p101 = scmp.ne.s32.totalorder %s84, %s100
      %p102 = scmp.eq.s32.totalorder %s27, 0
      %p103 = por %p101, %p102
      %s105 = sadd.s32 %s104, 1
      %p108 = scmp.eq.s32.totalorder %s21, 1
      %p109 = scmp.ne.s32.totalorder %s104, %s106
      %p110 = scmp.eq.s32.totalorder %s21, 0
      %p111 = por %p109, %p110
      %p112 = scmp.ne.s32.totalorder %s104, %s106
      %p113 = scmp.eq.s32.totalorder %s26, 1
      %p114 = por %p112, %p113
      %p115 = scmp.ne.s32.totalorder %s106, %s107
      %p116 = scmp.eq.s32.totalorder %s26, 0
      %p117 = por %p115, %p116
      %p118 = scmp.ne.s32.totalorder %s106, %s107
      %p119 = scmp.eq.s32.totalorder %s27, 1
      %p120 = por %p118, %p119
      %p122 = scmp.ne.s32.totalorder %s107, %s121
      %p123 = scmp.eq.s32.totalorder %s27, 0
      %p124 = por %p122, %p123
      %s126 = sadd.s32 %s125, 1
      %p129 = scmp.eq.s32.totalorder %s21, 1
      %p130 = scmp.ne.s32.totalorder %s125, %s127
      %p131 = scmp.eq.s32.totalorder %s21, 0
      %p132 = por %p130, %p131
      %p133 = scmp.ne.s32.totalorder %s125, %s127
      %p134 = scmp.eq.s32.totalorder %s26, 1
      %p135 = por %p133, %p134
      %p136 = scmp.ne.s32.totalorder %s127, %s128
      %p137 = scmp.eq.s32.totalorder %s26, 0
      %p138 = por %p136, %p137
      %p139 = scmp.ne.s32.totalorder %s127, %s128
      %p140 = scmp.eq.s32.totalorder %s27, 1
      %p141 = por %p139, %p140
      %p143 = scmp.ne.s32.totalorder %s128, %s142
      %p144 = scmp.eq.s32.totalorder %s27, 0
      %p145 = por %p143, %p144
      %s147 = sadd.s32 %s146, 1
      %p150 = scmp.eq.s32.totalorder %s21, 1
      %p151 = scmp.ne.s32.totalorder %s146, %s148
      %p152 = scmp.eq.s32.totalorder %s21, 0
      %p153 = por %p151, %p152
      %p154 = scmp.ne.s32.totalorder %s146, %s148
      %p155 = scmp.eq.s32.totalorder %s26, 1
      %p156 = por %p154, %p155
      %p157 = scmp.ne.s32.totalorder %s148, %s149
      %p158 = scmp.eq.s32.totalorder %s26, 0
      %p159 = por %p157, %p158
      %p160 = scmp.ne.s32.totalorder %s148, %s149
      %p161 = scmp.eq.s32.totalorder %s27, 1
      %p162 = por %p160, %p161
      %p164 = scmp.ne.s32.totalorder %s149, %s163
      %p165 = scmp.eq.s32.totalorder %s27, 0
      %p166 = por %p164, %p165
      %s167 = ssub.s32 %s28, %s47
      %s168 = ssub.s32 %s29, %s43
      %s169 = sor.u32 %s167, %s168
      %p170 = scmp.eq.s32.totalorder %s169, 0
      %s172 = sadd.s32 %s171, 1
      %s173 = scalar_select %p170, %s171, %s172
      %p176 = pneg %p170
      %p177 = scmp.eq.s32.totalorder %s21, 1
      %p178 = por %p176, %p177
      %p179 = scmp.ne.s32.totalorder %s171, %s174
      %p180 = scmp.eq.s32.totalorder %s21, 0
      %p181 = por %p179, %p180
      %p182 = scmp.ne.s32.totalorder %s171, %s174
      %p183 = scmp.eq.s32.totalorder %s26, 1
      %p184 = por %p182, %p183
      %p185 = scmp.ne.s32.totalorder %s174, %s175
      %p186 = scmp.eq.s32.totalorder %s26, 0
      %p187 = por %p185, %p186
      %p188 = scmp.ne.s32.totalorder %s174, %s175
      %p189 = scmp.eq.s32.totalorder %s27, 1
      %p190 = por %p188, %p189
      %p192 = scmp.ne.s32.totalorder %s175, %s191
      %p193 = scmp.eq.s32.totalorder %s27, 0
      %p194 = por %p192, %p193
      %p195 = scmp.le.s32.totalorder 1, %s21
      %p196 = scmp.lt.s32.totalorder %s21, 3
      %p197 = pnand %p195, %p196
      %p198 = pneg %p197
      // Predicated region
      $region9: #{tpu_custom_call.1} parent=5 // pred_check
        _
      $region10: #{tpu_custom_call.1} parent=5 // pred_check_branch
        %200 = sbr.rel (%p197) target = $region12
      $region11: #{tpu_custom_call.1} parent=5 // pred_region
        %s201 = ssub.s32 %s21, 1
        // Predicated region
        $region13: #{tpu_custom_call.1} parent=11 // pred_check
          %p202 = pneg %p117
        $region14: #{tpu_custom_call.1} parent=11 // pred_check_branch
          %204 = sbr.rel (%p202) target = $region16
        $region15: #{tpu_custom_call.1} parent=11 // pred_region
          %206 = vsyncadd [#allocation10], 0
          %s207 = sshll.u32 %s2, 4
          %s208 = int_to_ptr.hbm [resolvable:$true] %s207
          %s209 = sshll.u32 [#allocation11], 4
          %s210 = int_to_ptr.vmem [resolvable:$true] %s209
          %215 = dma.hbm_to_vmem [thread:$0]  %s208, 512, %s210, [#allocation10], 128, 128, 8
        $region16: #{tpu_custom_call.1} parent=11 // pred_fallthru
          _
        // Predicated region
        $region17: #{tpu_custom_call.1} parent=11 // pred_check
          %p216 = pneg %p138
        $region18: #{tpu_custom_call.1} parent=11 // pred_check_branch
          %218 = sbr.rel (%p216) target = $region20
        $region19: #{tpu_custom_call.1} parent=11 // pred_region
          %220 = vsyncadd [#allocation13], 0
          %s221 = sshll.u32 %s3, 4
          %s222 = int_to_ptr.hbm [resolvable:$true] %s221
          %s223 = sshll.u32 [#allocation12], 4
          %s224 = int_to_ptr.vmem [resolvable:$true] %s223
          %229 = dma.hbm_to_vmem [thread:$0]  %s222, 512, %s224, [#allocation13], 128, 128, 8
        $region20: #{tpu_custom_call.1} parent=11 // pred_fallthru
          _
        // Predicated region
        $region21: #{tpu_custom_call.1} parent=11 // pred_check
          %p230 = pneg %p159
        $region22: #{tpu_custom_call.1} parent=11 // pred_check_branch
          %232 = sbr.rel (%p230) target = $region24
        $region23: #{tpu_custom_call.1} parent=11 // pred_region
          %234 = vsyncadd [#allocation13], 0
          %s235 = sshll.u32 %s4, 4
          %s236 = int_to_ptr.hbm [resolvable:$true] %s235
          %s237 = sshll.u32 [#allocation14], 4
          %s238 = int_to_ptr.vmem [resolvable:$true] %s237
          %243 = dma.hbm_to_vmem [thread:$0]  %s236, 512, %s238, [#allocation13], 128, 128, 8
        $region24: #{tpu_custom_call.1} parent=11 // pred_fallthru
          _
      $region12: #{tpu_custom_call.1} parent=5 // pred_fallthru
        _
      %p244 = scmp.lt.s32.totalorder %s21, 2
      // Predicated region
      $region25: #{tpu_custom_call.1} parent=5 // pred_check
        %p245 = pneg %p244
      $region26: #{tpu_custom_call.1} parent=5 // pred_check_branch
        %247 = sbr.rel (%p245) target = $region28
      $region27: #{tpu_custom_call.1} parent=5 // pred_region
        // Predicated region
        $region29: #{tpu_custom_call.1} parent=27 // pred_check
          %p248 = pneg %p62
        $region30: #{tpu_custom_call.1} parent=27 // pred_check_branch
          %250 = sbr.rel (%p248) target = $region32
        $region31: #{tpu_custom_call.1} parent=27 // pred_region
          %s251 = sand.u32 %s52, 1
          %s252 = scalar_lea.sflag [#allocation7], %s251
          %s253 = sand.u32 %s52, 1
          %s254 = smul.addr %s253, 8
          %s255 = scalar_lea.vmem [#allocation6], %s254
          %257 = vsyncadd %s252, 0
          %s258 = sadd.s32 %s29, %s28
          %s259 = smul.addr %s258, 8
          %s260 = scalar_lea.hbm %s0, %s259
          %s262 = sshll.u32 %s260, 4
          %s263 = int_to_ptr.hbm [resolvable:$true] %s262
          %s264 = sshll.u32 %s255, 4
          %s265 = int_to_ptr.vmem [resolvable:$true] %s264
          %267 = dma.hbm_to_vmem [thread:$0]  %s263, 128, %s265, %s252
        $region32: #{tpu_custom_call.1} parent=27 // pred_fallthru
          _
        // Predicated region
        $region33: #{tpu_custom_call.1} parent=27 // pred_check
          %p268 = pneg %p90
        $region34: #{tpu_custom_call.1} parent=27 // pred_check_branch
          %270 = sbr.rel (%p268) target = $region36
        $region35: #{tpu_custom_call.1} parent=27 // pred_region
          %s271 = sand.u32 %s21, 1
          %s272 = scalar_lea.sflag [#allocation10], %s271
          %s273 = sand.u32 %s80, 1
          %s274 = smul.addr %s273, 8
          %s275 = scalar_lea.vmem [#allocation9], %s274
          %277 = vsyncadd %s272, 0
          %s278 = sadd.s32 %s30, %s28
          %s279 = smul.addr %s278, 8
          %s280 = scalar_lea.hbm %s1, %s279
          %s282 = sshll.u32 %s280, 4
          %s283 = int_to_ptr.hbm [resolvable:$true] %s282
          %s284 = sshll.u32 %s275, 4
          %s285 = int_to_ptr.vmem [resolvable:$true] %s284
          %287 = dma.hbm_to_vmem [thread:$0]  %s283, 128, %s285, %s272
        $region36: #{tpu_custom_call.1} parent=27 // pred_fallthru
          _
      $region28: #{tpu_custom_call.1} parent=5 // pred_fallthru
        _
      %p288 = scmp.le.s32.totalorder 1, %s21
      %p289 = scmp.lt.s32.totalorder %s21, 3
      %p290 = pnand %p288, %p289
      %p291 = pneg %p290
      // Predicated region
      $region37: #{tpu_custom_call.1} parent=5 // pred_check
        _
      $region38: #{tpu_custom_call.1} parent=5 // pred_check_branch
        %293 = sbr.rel (%p290) target = $region40
      $region39: #{tpu_custom_call.1} parent=5 // pred_region
        %s294 = ssub.s32 %s21, 1
        %s295 = sand.u32 %s55, 1
        %s296 = scalar_lea.sflag [#allocation7], %s295
        %s297 = sand.u32 %s55, 1
        %s298 = smul.addr %s297, 8
        %s299 = scalar_lea.vmem [#allocation6], %s298
        // Predicated region
        $region41: #{tpu_custom_call.1} parent=39 // pred_check
          %p300 = pneg %p68
        $region42: #{tpu_custom_call.1} parent=39 // pred_check_branch
          %302 = sbr.rel (%p300) target = $region44
        $region43: #{tpu_custom_call.1} parent=39 // pred_region
          %304 = dma.done %s296, 128
        $region44: #{tpu_custom_call.1} parent=39 // pred_fallthru
          _
        %s305 = sand.u32 %s26, 1
        %s306 = scalar_lea.sflag [#allocation10], %s305
        %s307 = sand.u32 %s83, 1
        %s308 = smul.addr %s307, 8
        %s309 = scalar_lea.vmem [#allocation9], %s308
        // Predicated region
        $region45: #{tpu_custom_call.1} parent=39 // pred_check
          %p310 = pneg %p96
        $region46: #{tpu_custom_call.1} parent=39 // pred_check_branch
          %312 = sbr.rel (%p310) target = $region48
        $region47: #{tpu_custom_call.1} parent=39 // pred_region
          %314 = dma.done %s306, 128
        $region48: #{tpu_custom_call.1} parent=39 // pred_fallthru
          _
        // Predicated region
        $region49: #{tpu_custom_call.1} parent=39 // pred_check
          %p315 = pneg %p117
        $region50: #{tpu_custom_call.1} parent=39 // pred_check_branch
          %317 = sbr.rel (%p315) target = $region52
        $region51: #{tpu_custom_call.1} parent=39 // pred_region
          %319 = dma.done [#allocation10], 512
        $region52: #{tpu_custom_call.1} parent=39 // pred_fallthru
          _
        // Predicated region
        $region53: #{tpu_custom_call.1} parent=39 // pred_check
          %p320 = pneg %p138
        $region54: #{tpu_custom_call.1} parent=39 // pred_check_branch
          %322 = sbr.rel (%p320) target = $region56
        $region55: #{tpu_custom_call.1} parent=39 // pred_region
          %324 = dma.done [#allocation13], 512
        $region56: #{tpu_custom_call.1} parent=39 // pred_fallthru
          _
        // Predicated region
        $region57: #{tpu_custom_call.1} parent=39 // pred_check
          %p325 = pneg %p159
        $region58: #{tpu_custom_call.1} parent=39 // pred_check_branch
          %327 = sbr.rel (%p325) target = $region60
        $region59: #{tpu_custom_call.1} parent=39 // pred_region
          %329 = dma.done [#allocation13], 512
        $region60: #{tpu_custom_call.1} parent=39 // pred_fallthru
          _
        %s330 = sand.u32 %s55, 1
        %s331 = scalar_lea.sflag [#allocation7], %s330
        %s332 = sand.u32 %s55, 1
        %s333 = smul.addr %s332, 8
        %s334 = scalar_lea.vmem [#allocation6], %s333
        %p335 = pneg %p68
        %p336 = pneg %p65
        %s337 = sand.u32 %s26, 1
        %s338 = scalar_lea.sflag [#allocation10], %s337
        %s339 = sand.u32 %s83, 1
        %s340 = smul.addr %s339, 8
        %s341 = scalar_lea.vmem [#allocation9], %s340
        %p342 = pneg %p96
        %p343 = pneg %p93
        %p344 = pneg %p117
        %p345 = pneg %p114
        %p346 = pneg %p138
        %p347 = pneg %p135
        %p348 = pneg %p159
        %p349 = pneg %p156
        %p350 = pneg %p187
        %p351 = pneg %p184
        %s352 = sand.u32 %s174, 1
        %s353 = scalar_lea.sflag [#allocation8], %s352
        %s354 = sand.u32 %s174, 1
        %s355 = smul.addr %s354, 8
        %s356 = scalar_lea.vmem [#allocation15], %s355
        %s357 = smul.u32 %s32, 8
        %s358 = smul.u32 %s33, 8
        %p359 = scmp.eq.s32.totalorder %s33, 0
        // Predicated region
        $region61: #{tpu_custom_call.1} parent=39 // pred_check
          %p360 = pneg %p359
        $region62: #{tpu_custom_call.1} parent=39 // pred_check_branch
          %362 = sbr.rel (%p360) target = $region64
        $region63: #{tpu_custom_call.1} parent=39 // pred_region
          %v363 = vld [vmem:[%s299] sm:$0xff]
          %v364 = vld [vmem:[#allocation11] sm:$0xff]
          %v365 = vld [vmem:[#allocation11 + $0x8] sm:$0xff]
          %v366 = vld [vmem:[#allocation11 + $0x10] sm:$0xff]
          %v367 = vld [vmem:[#allocation11 + $0x18] sm:$0xff]
          %vm368 = vcmask 261120
          %v370 = vsel %vm368, %v363, 0
          %372 = vmatpush.msra.mxu0 0.0
          %373 = vmatpush.msra.mxu0 0.0
          %374 = vmatpush.msra.mxu0 0.0
          %375 = vmatpush.msra.mxu0 0.0
          %376 = vmatpush.msra.mxu0 0.0
          %377 = vmatpush.msra.mxu0 0.0
          %378 = vmatpush.msra.mxu0 0.0
          %379 = vmatpush.msra.mxu0 0.0
          %380 = vmatpush.msra.mxu0 0.0
          %381 = vmatpush.msra.mxu0 0.0
          %382 = vmatpush.msra.mxu0 0.0
          %383 = vmatpush.msra.mxu0 0.0
          %384 = vmatpush.msra.mxu0 %v367
          %385 = vmatpush.msra.mxu0 %v366
          %386 = vmatpush.msra.mxu0 %v365
          %387 = vmatpush.msra.mxu0 %v364
          %388 = vmatmul.f32.gmra.mxu0 %v370
          %v389 = vpop.f32.mrf.mxu0
          %v390 = vadd.f32 0.0, %v389
          %391 = vdwg.mxu0
          %v392 = vmul.f32 %v390, 0.17677669
          %393 = vst.msk [vmem:[#allocation2] sm:$0xff] %vm368, %v392
          %vm394 = vcmask 31744
          %395 = vst.msk [vmem:[#allocation3] sm:$0xff] %vm394, -1e+30
          %396 = vst.msk [vmem:[#allocation4] sm:$0xff] %vm394, 0.0
          %397 = vst.msk [vmem:[#allocation5] sm:$0xff] %vm368, 0.0
        $region64: #{tpu_custom_call.1} parent=39 // pred_fallthru
          _
        %s398 = sadd.s32 %s357, 7
        %p399 = scmp.le.s32.totalorder %s358, %s398
        // Predicated region
        $region65: #{tpu_custom_call.1} parent=39 // pred_check
          %p400 = pneg %p399
        $region66: #{tpu_custom_call.1} parent=39 // pred_check_branch
          %402 = sbr.rel (%p400) target = $region68
        $region67: #{tpu_custom_call.1} parent=39 // pred_region
          %v403 = vld [vmem:[%s309] sm:$0xff]
          %v404 = vld [vmem:[#allocation12] sm:$0xff]
          %v405 = vld [vmem:[#allocation12 + $0x8] sm:$0xff]
          %v406 = vld [vmem:[#allocation12 + $0x10] sm:$0xff]
          %v407 = vld [vmem:[#allocation12 + $0x18] sm:$0xff]
          %vm408 = vcmask 261120
          %v410 = vsel %vm408, %v403, 0
          %412 = vmatpush.msra.mxu0 0.0
          %413 = vmatpush.msra.mxu0 0.0
          %414 = vmatpush.msra.mxu0 0.0
          %415 = vmatpush.msra.mxu0 0.0
          %416 = vmatpush.msra.mxu0 0.0
          %417 = vmatpush.msra.mxu0 0.0
          %418 = vmatpush.msra.mxu0 0.0
          %419 = vmatpush.msra.mxu0 0.0
          %420 = vmatpush.msra.mxu0 0.0
          %421 = vmatpush.msra.mxu0 0.0
          %422 = vmatpush.msra.mxu0 0.0
          %423 = vmatpush.msra.mxu0 0.0
          %424 = vmatpush.msra.mxu0 %v407
          %425 = vmatpush.msra.mxu0 %v406
          %426 = vmatpush.msra.mxu0 %v405
          %427 = vmatpush.msra.mxu0 %v404
          %428 = vmatmul.f32.gmra.mxu0 %v410
          %v429 = vpop.f32.mrf.mxu0
          %v430 = vadd.f32 0.0, %v429
          %431 = vdwg.mxu0
          %v432 = vld [vmem:[#allocation14] sm:$0xff]
          %v433 = vld [vmem:[#allocation14 + $0x8] sm:$0xff]
          %v434 = vld [vmem:[#allocation14 + $0x10] sm:$0xff]
          %v435 = vld [vmem:[#allocation14 + $0x18] sm:$0xff]
          %436 = vmatpush.msra.mxu0 0.0
          %437 = vmatpush.msra.mxu0 0.0
          %438 = vmatpush.msra.mxu0 0.0
          %439 = vmatpush.msra.mxu0 0.0
          %440 = vmatpush.msra.mxu0 0.0
          %441 = vmatpush.msra.mxu0 0.0
          %442 = vmatpush.msra.mxu0 0.0
          %443 = vmatpush.msra.mxu0 0.0
          %444 = vmatpush.msra.mxu0 0.0
          %445 = vmatpush.msra.mxu0 0.0
          %446 = vmatpush.msra.mxu0 0.0
          %447 = vmatpush.msra.mxu0 0.0
          %448 = vmatpush.msra.mxu0 %v435
          %449 = vmatpush.msra.mxu0 %v434
          %450 = vmatpush.msra.mxu0 %v433
          %451 = vmatpush.msra.mxu0 %v432
          %452 = vmatmul.f32.gmra.mxu0 %v410
          %v453 = vpop.f32.mrf.mxu0
          %v454 = vadd.f32 0.0, %v453
          %455 = vdwg.mxu0
          %v456 = vld [vmem:[#allocation2] sm:$0xff]
          %v457 = vlaneseq
          %v458 = vshrl.u32 %v457, 7
          %v459 = vstv %s357
          %v460 = vadd.s32 %v459, %v458
          %v461 = vlaneseq
          %v462 = vand.u32 %v461, 127
          %v463 = vstv %s358
          %v464 = vadd.s32 %v463, %v462
          %vm465 = vcmp.le.s32.totalorder %v464, %v460
          %vm466 = vcmask 64512
          %v468 = vsel %vm466, %v456, 0
          %v471 = vsel %vm466, %v430, 0
          %473 = vmatpush.xpose.msra.mxu0 0.0
          %474 = vmatpush.xpose.msra.mxu0 0.0
          %475 = vmatpush.xpose.msra.mxu0 0.0
          %476 = vmatpush.xpose.msra.mxu0 0.0
          %477 = vmatpush.xpose.msra.mxu0 0.0
          %478 = vmatpush.xpose.msra.mxu0 0.0
          %479 = vmatpush.xpose.msra.mxu0 0.0
          %480 = vmatpush.xpose.msra.mxu0 0.0
          %481 = vmatpush.xpose.msra.mxu0 0.0
          %482 = vmatpush.xpose.msra.mxu0 0.0
          %483 = vmatpush.xpose.msra.mxu0 0.0
          %484 = vmatpush.xpose.msra.mxu0 0.0
          %485 = vmatpush.xpose.msra.mxu0 0.0
          %486 = vmatpush.xpose.msra.mxu0 0.0
          %487 = vmatpush.xpose.msra.mxu0 0.0
          %488 = vmatpush.xpose.msra.mxu0 %v471
          %489 = vmatmul.f32.gmra.mxu0 %v468
          %v490 = vpop.f32.mrf.mxu0
          %v491 = vadd.f32 0.0, %v490
          %492 = vdwg.mxu0
          %v493 = vsel %vm465, %v491, -1e+30
          %v494 = vld [vmem:[#allocation3] sm:$0xff]
          %v495 = vsel %vm466, %v493, -inf
          %496 = vmax.xlane.f32.xlu0 %v495
          %v497 = vpop.xlane.xlu0 %496
          %v498 = vmax.f32 %v494, %v497
          %v499 = vsub.f32 %v494, %v498
          %v500 = vmul.f32 %v499, 1.442695
          %v501 = vpow.pop %v500
          %503 = vset.pattern.permute.xlu0 0
          %504 = vperm.xlu0 %503, %v498
          %v505 = vpop.permute.xlu0 %504
          %v507 = vsub.f32 %v493, %v505
          %v508 = vmul.f32 %v507, 1.442695
          %v509 = vpow.pop %v508
          %v510 = vld [vmem:[#allocation4] sm:$0xff]
          %v511 = vmul.f32 %v501, %v510
          %v512 = vsel %vm466, %v509, 0.0
          %513 = vadd.xlane.f32.xlu0 %v512
          %v514 = vpop.xlane.xlu0 %513
          %v515 = vadd.f32 %v511, %v514
          %vm516 = vcmask 7168
          %517 = vst.msk [vmem:[#allocation4] sm:$0xff] %vm516, %v515
          %v519 = vsel %vm466, %v509, 0
          %521 = vmatpush.msra.mxu0 0.0
          %522 = vmatpush.msra.mxu0 0.0
          %523 = vmatpush.msra.mxu0 0.0
          %524 = vmatpush.msra.mxu0 0.0
          %525 = vmatpush.msra.mxu0 0.0
          %526 = vmatpush.msra.mxu0 0.0
          %527 = vmatpush.msra.mxu0 0.0
          %528 = vmatpush.msra.mxu0 0.0
          %529 = vmatpush.msra.mxu0 0.0
          %530 = vmatpush.msra.mxu0 0.0
          %531 = vmatpush.msra.mxu0 0.0
          %532 = vmatpush.msra.mxu0 0.0
          %533 = vmatpush.msra.mxu0 0.0
          %534 = vmatpush.msra.mxu0 0.0
          %535 = vmatpush.msra.mxu0 0.0
          %536 = vmatpush.msra.mxu0 %v454
          %537 = vmatmul.f32.gmra.mxu0 %v519
          %v538 = vpop.f32.mrf.mxu0
          %v539 = vadd.f32 0.0, %v538
          %540 = vdwg.mxu0
          %v541 = vld [vmem:[#allocation5] sm:$0xff]
          %543 = vset.pattern.permute.xlu0 0
          %544 = vperm.xlu0 %543, %v501
          %v545 = vpop.permute.xlu0 %544
          %v547 = vmul.f32 %v545, %v541
          %v548 = vadd.f32 %v547, %v539
          %549 = vst.msk [vmem:[#allocation5] sm:$0xff] %vm466, %v548
          %550 = vst.msk [vmem:[#allocation3] sm:$0xff] %vm516, %v498
          %551 = vrot.lane.b32.xlu0 %v456, 120
          %v552 = vpop.permute.xlu0 %551
          %553 = vrot.lane.b32.xlu0 %v430, 120
          %v554 = vpop.permute.xlu0 %553
          %v555 = vsel %vm466, %v552, 0
          %v557 = vsel %vm466, %v554, 0
          %559 = vmatpush.xpose.msra.mxu0 0.0
          %560 = vmatpush.xpose.msra.mxu0 0.0
          %561 = vmatpush.xpose.msra.mxu0 0.0
          %562 = vmatpush.xpose.msra.mxu0 0.0
          %563 = vmatpush.xpose.msra.mxu0 0.0
          %564 = vmatpush.xpose.msra.mxu0 0.0
          %565 = vmatpush.xpose.msra.mxu0 0.0
          %566 = vmatpush.xpose.msra.mxu0 0.0
          %567 = vmatpush.xpose.msra.mxu0 0.0
          %568 = vmatpush.xpose.msra.mxu0 0.0
          %569 = vmatpush.xpose.msra.mxu0 0.0
          %570 = vmatpush.xpose.msra.mxu0 0.0
          %571 = vmatpush.xpose.msra.mxu0 0.0
          %572 = vmatpush.xpose.msra.mxu0 0.0
          %573 = vmatpush.xpose.msra.mxu0 0.0
          %574 = vmatpush.xpose.msra.mxu0 %v557
          %575 = vmatmul.f32.gmra.mxu0 %v555
          %v576 = vpop.f32.mrf.mxu0
          %v577 = vadd.f32 0.0, %v576
          %578 = vdwg.mxu0
          %v579 = vsel %vm465, %v577, -1e+30
          %v580 = vld [vmem:[#allocation3] sm:$0xff]
          %v581 = vsel %vm466, %v579, -inf
          %582 = vmax.xlane.f32.xlu0 %v581
          %v583 = vpop.xlane.xlu0 %582
          %v584 = vmax.f32 %v580, %v583
          %v585 = vsub.f32 %v580, %v584
          %v586 = vmul.f32 %v585, 1.442695
          %v587 = vpow.pop %v586
          %589 = vset.pattern.permute.xlu0 1
          %590 = vperm.xlu0 %589, %v584
          %v591 = vpop.permute.xlu0 %590
          %v593 = vsub.f32 %v579, %v591
          %v594 = vmul.f32 %v593, 1.442695
          %v595 = vpow.pop %v594
          %v596 = vld [vmem:[#allocation4] sm:$0xff]
          %v597 = vmul.f32 %v587, %v596
          %v598 = vsel %vm466, %v595, 0.0
          %599 = vadd.xlane.f32.xlu0 %v598
          %v600 = vpop.xlane.xlu0 %599
          %v601 = vadd.f32 %v597, %v600
          %vm602 = vcmask 15368
          %603 = vst.msk [vmem:[#allocation4] sm:$0xff] %vm602, %v601
          %605 = vrot.lane.b32.xlu0 %v454, 120
          %v606 = vpop.permute.xlu0 %605
          %v609 = vsel %vm466, %v595, 0
          %611 = vmatpush.msra.mxu0 0.0
          %612 = vmatpush.msra.mxu0 0.0
          %613 = vmatpush.msra.mxu0 0.0
          %614 = vmatpush.msra.mxu0 0.0
          %615 = vmatpush.msra.mxu0 0.0
          %616 = vmatpush.msra.mxu0 0.0
          %617 = vmatpush.msra.mxu0 0.0
          %618 = vmatpush.msra.mxu0 0.0
          %619 = vmatpush.msra.mxu0 0.0
          %620 = vmatpush.msra.mxu0 0.0
          %621 = vmatpush.msra.mxu0 0.0
          %622 = vmatpush.msra.mxu0 0.0
          %623 = vmatpush.msra.mxu0 0.0
          %624 = vmatpush.msra.mxu0 0.0
          %625 = vmatpush.msra.mxu0 0.0
          %626 = vmatpush.msra.mxu0 %v606
          %627 = vmatmul.f32.gmra.mxu0 %v609
          %v628 = vpop.f32.mrf.mxu0
          %v629 = vadd.f32 0.0, %v628
          %630 = vdwg.mxu0
          %v631 = vld [vmem:[#allocation5] sm:$0xff]
          %633 = vset.pattern.permute.xlu0 1
          %634 = vperm.xlu0 %633, %v587
          %v635 = vpop.permute.xlu0 %634
          %v637 = vmul.f32 %v635, %v631
          %639 = vrot.lane.b32.xlu0 %v629, 8
          %v640 = vpop.permute.xlu0 %639
          %v642 = vadd.f32 %v637, %v640
          %vm643 = vcmask 130112
          %644 = vst.msk [vmem:[#allocation5] sm:$0xff] %vm643, %v642
          %645 = vst.msk [vmem:[#allocation3] sm:$0xff] %vm602, %v584
          %646 = vrot.lane.b32.xlu0 %v456, 112
          %v647 = vpop.permute.xlu0 %646
          %648 = vrot.lane.b32.xlu0 %v430, 112
          %v649 = vpop.permute.xlu0 %648
          %v650 = vsel %vm466, %v647, 0
          %v652 = vsel %vm466, %v649, 0
          %654 = vmatpush.xpose.msra.mxu0 0.0
          %655 = vmatpush.xpose.msra.mxu0 0.0
          %656 = vmatpush.xpose.msra.mxu0 0.0
          %657 = vmatpush.xpose.msra.mxu0 0.0
          %658 = vmatpush.xpose.msra.mxu0 0.0
          %659 = vmatpush.xpose.msra.mxu0 0.0
          %660 = vmatpush.xpose.msra.mxu0 0.0
          %661 = vmatpush.xpose.msra.mxu0 0.0
          %662 = vmatpush.xpose.msra.mxu0 0.0
          %663 = vmatpush.xpose.msra.mxu0 0.0
          %664 = vmatpush.xpose.msra.mxu0 0.0
          %665 = vmatpush.xpose.msra.mxu0 0.0
          %666 = vmatpush.xpose.msra.mxu0 0.0
          %667 = vmatpush.xpose.msra.mxu0 0.0
          %668 = vmatpush.xpose.msra.mxu0 0.0
          %669 = vmatpush.xpose.msra.mxu0 %v652
          %670 = vmatmul.f32.gmra.mxu0 %v650
          %v671 = vpop.f32.mrf.mxu0
          %v672 = vadd.f32 0.0, %v671
          %673 = vdwg.mxu0
          %v674 = vsel %vm465, %v672, -1e+30
          %v675 = vld [vmem:[#allocation3] sm:$0xff]
          %v676 = vsel %vm466, %v674, -inf
          %677 = vmax.xlane.f32.xlu0 %v676
          %v678 = vpop.xlane.xlu0 %677
          %v679 = vmax.f32 %v675, %v678
          %v680 = vsub.f32 %v675, %v679
          %v681 = vmul.f32 %v680, 1.442695
          %v682 = vpow.pop %v681
          %684 = vset.pattern.permute.xlu0 2
          %685 = vperm.xlu0 %684, %v679
          %v686 = vpop.permute.xlu0 %685
          %v688 = vsub.f32 %v674, %v686
          %v689 = vmul.f32 %v688, 1.442695
          %v690 = vpow.pop %v689
          %v691 = vld [vmem:[#allocation4] sm:$0xff]
          %v692 = vmul.f32 %v682, %v691
          %v693 = vsel %vm466, %v690, 0.0
          %694 = vadd.xlane.f32.xlu0 %v693
          %v695 = vpop.xlane.xlu0 %694
          %v696 = vadd.f32 %v692, %v695
          %vm697 = vcmask 23568
          %698 = vst.msk [vmem:[#allocation4] sm:$0xff] %vm697, %v696
          %699 = vrot.lane.b32.xlu0 %v454, 112
          %v700 = vpop.permute.xlu0 %699
          %v703 = vsel %vm466, %v690, 0
          %705 = vmatpush.msra.mxu0 0.0
          %706 = vmatpush.msra.mxu0 0.0
          %707 = vmatpush.msra.mxu0 0.0
          %708 = vmatpush.msra.mxu0 0.0
          %709 = vmatpush.msra.mxu0 0.0
          %710 = vmatpush.msra.mxu0 0.0
          %711 = vmatpush.msra.mxu0 0.0
          %712 = vmatpush.msra.mxu0 0.0
          %713 = vmatpush.msra.mxu0 0.0
          %714 = vmatpush.msra.mxu0 0.0
          %715 = vmatpush.msra.mxu0 0.0
          %716 = vmatpush.msra.mxu0 0.0
          %717 = vmatpush.msra.mxu0 0.0
          %718 = vmatpush.msra.mxu0 0.0
          %719 = vmatpush.msra.mxu0 0.0
          %720 = vmatpush.msra.mxu0 %v700
          %721 = vmatmul.f32.gmra.mxu0 %v703
          %v722 = vpop.f32.mrf.mxu0
          %v723 = vadd.f32 0.0, %v722
          %724 = vdwg.mxu0
          %v725 = vld [vmem:[#allocation5] sm:$0xff]
          %727 = vset.pattern.permute.xlu0 2
          %728 = vperm.xlu0 %727, %v682
          %v729 = vpop.permute.xlu0 %728
          %v731 = vmul.f32 %v729, %v725
          %733 = vrot.lane.b32.xlu0 %v723, 16
          %v734 = vpop.permute.xlu0 %733
          %v736 = vadd.f32 %v731, %v734
          %vm737 = vcmask 195712
          %738 = vst.msk [vmem:[#allocation5] sm:$0xff] %vm737, %v736
          %739 = vst.msk [vmem:[#allocation3] sm:$0xff] %vm697, %v679
          %740 = vrot.lane.b32.xlu0 %v456, 104
          %v741 = vpop.permute.xlu0 %740
          %742 = vrot.lane.b32.xlu0 %v430, 104
          %v743 = vpop.permute.xlu0 %742
          %v744 = vsel %vm466, %v741, 0
          %v746 = vsel %vm466, %v743, 0
          %748 = vmatpush.xpose.msra.mxu0 0.0
          %749 = vmatpush.xpose.msra.mxu0 0.0
          %750 = vmatpush.xpose.msra.mxu0 0.0
          %751 = vmatpush.xpose.msra.mxu0 0.0
          %752 = vmatpush.xpose.msra.mxu0 0.0
          %753 = vmatpush.xpose.msra.mxu0 0.0
          %754 = vmatpush.xpose.msra.mxu0 0.0
          %755 = vmatpush.xpose.msra.mxu0 0.0
          %756 = vmatpush.xpose.msra.mxu0 0.0
          %757 = vmatpush.xpose.msra.mxu0 0.0
          %758 = vmatpush.xpose.msra.mxu0 0.0
          %759 = vmatpush.xpose.msra.mxu0 0.0
          %760 = vmatpush.xpose.msra.mxu0 0.0
          %761 = vmatpush.xpose.msra.mxu0 0.0
          %762 = vmatpush.xpose.msra.mxu0 0.0
          %763 = vmatpush.xpose.msra.mxu0 %v746
          %764 = vmatmul.f32.gmra.mxu0 %v744
          %v765 = vpop.f32.mrf.mxu0
          %v766 = vadd.f32 0.0, %v765
          %767 = vdwg.mxu0
          %v768 = vsel %vm465, %v766, -1e+30
          %v769 = vld [vmem:[#allocation3] sm:$0xff]
          %v770 = vsel %vm466, %v768, -inf
          %771 = vmax.xlane.f32.xlu0 %v770
          %v772 = vpop.xlane.xlu0 %771
          %v773 = vmax.f32 %v769, %v772
          %v774 = vsub.f32 %v769, %v773
          %v775 = vmul.f32 %v774, 1.442695
          %v776 = vpow.pop %v775
          %778 = vset.pattern.permute.xlu0 3
          %779 = vperm.xlu0 %778, %v773
          %v780 = vpop.permute.xlu0 %779
          %v782 = vsub.f32 %v768, %v780
          %v783 = vmul.f32 %v782, 1.442695
          %v784 = vpow.pop %v783
          %v785 = vld [vmem:[#allocation4] sm:$0xff]
          %v786 = vmul.f32 %v776, %v785
          %v787 = vsel %vm466, %v784, 0.0
          %788 = vadd.xlane.f32.xlu0 %v787
          %v789 = vpop.xlane.xlu0 %788
          %v790 = vadd.f32 %v786, %v789
          %vm791 = vcmask 31768
          %792 = vst.msk [vmem:[#allocation4] sm:$0xff] %vm791, %v790
          %793 = vrot.lane.b32.xlu0 %v454, 104
          %v794 = vpop.permute.xlu0 %793
          %v797 = vsel %vm466, %v784, 0
          %799 = vmatpush.msra.mxu0 0.0
          %800 = vmatpush.msra.mxu0 0.0
          %801 = vmatpush.msra.mxu0 0.0
          %802 = vmatpush.msra.mxu0 0.0
          %803 = vmatpush.msra.mxu0 0.0
          %804 = vmatpush.msra.mxu0 0.0
          %805 = vmatpush.msra.mxu0 0.0
          %806 = vmatpush.msra.mxu0 0.0
          %807 = vmatpush.msra.mxu0 0.0
          %808 = vmatpush.msra.mxu0 0.0
          %809 = vmatpush.msra.mxu0 0.0
          %810 = vmatpush.msra.mxu0 0.0
          %811 = vmatpush.msra.mxu0 0.0
          %812 = vmatpush.msra.mxu0 0.0
          %813 = vmatpush.msra.mxu0 0.0
          %814 = vmatpush.msra.mxu0 %v794
          %815 = vmatmul.f32.gmra.mxu0 %v797
          %v816 = vpop.f32.mrf.mxu0
          %v817 = vadd.f32 0.0, %v816
          %818 = vdwg.mxu0
          %v819 = vld [vmem:[#allocation5] sm:$0xff]
          %821 = vset.pattern.permute.xlu0 3
          %822 = vperm.xlu0 %821, %v776
          %v823 = vpop.permute.xlu0 %822
          %v825 = vmul.f32 %v823, %v819
          %827 = vrot.lane.b32.xlu0 %v817, 24
          %v828 = vpop.permute.xlu0 %827
          %v830 = vadd.f32 %v825, %v828
          %vm831 = vcmask 261312
          %832 = vst.msk [vmem:[#allocation5] sm:$0xff] %vm831, %v830
          %833 = vst.msk [vmem:[#allocation3] sm:$0xff] %vm791, %v773
        $region68: #{tpu_custom_call.1} parent=39 // pred_fallthru
          _
        // Predicated region
        $region69: #{tpu_custom_call.1} parent=39 // pred_check
          %p834 = pneg %p359
        $region70: #{tpu_custom_call.1} parent=39 // pred_check_branch
          %836 = sbr.rel (%p834) target = $region72
        $region71: #{tpu_custom_call.1} parent=39 // pred_region
          %v837 = vld [vmem:[#allocation4] sm:$0xff]
          %v838 = vrcp.pop %v837
          %v839 = vmul.f32 %v837, %v838
          %v840 = vsub.f32 1.0, %v839
          %v841 = vmul.f32 %v838, %v840
          %v842 = vadd.f32 %v838, %v841
          %vm843 = vweird.f32 %v837
          %vm844 = vweird.f32 %v838
          %vm845 = vmor %vm843, %vm844
          %v846 = vsel %vm845, %v838, %v842
          %v847 = vand.u32 2147483647, %v837
          %vm848 = vcmp.eq.f32.partialorder %v847, 8.507059e+37
          %v849 = vand.u32 %v837, 2147483648
          %v850 = vor.u32 1.1754944e-38, %v849
          %v851 = vsel %vm848, %v850, %v846
          %v852 = vld [vmem:[#allocation5] sm:$0xff]
          %854 = vset.pattern.permute.xlu0 0
          %855 = vperm.xlu0 %854, %v851
          %v856 = vpop.permute.xlu0 %855
          %v858 = vmul.f32 %v852, %v856
          %859 = vset.pattern.permute.xlu0 1
          %860 = vperm.xlu0 %859, %v851
          %v861 = vpop.permute.xlu0 %860
          %v863 = vmul.f32 %v852, %v861
          %864 = vset.pattern.permute.xlu0 2
          %865 = vperm.xlu0 %864, %v851
          %v866 = vpop.permute.xlu0 %865
          %v868 = vmul.f32 %v852, %v866
          %869 = vset.pattern.permute.xlu0 3
          %870 = vperm.xlu0 %869, %v851
          %v871 = vpop.permute.xlu0 %870
          %v873 = vmul.f32 %v852, %v871
          %vm874 = vcmask 64512
          %v875 = vsel %vm874, %v858, %v863
          %vm876 = vcmask 130048
          %v877 = vsel %vm876, %v875, %v868
          %vm878 = vcmask 195584
          %v879 = vsel %vm878, %v877, %v873
          %vm880 = vcmask 261120
          %881 = vst.msk [vmem:[%s356] sm:$0xff] %vm880, %v879
        $region72: #{tpu_custom_call.1} parent=39 // pred_fallthru
          _
        %s882 = sand.u32 %s174, 1
        %s883 = scalar_lea.sflag [#allocation8], %s882
        %s884 = sand.u32 %s174, 1
        %s885 = smul.addr %s884, 8
        %s886 = scalar_lea.vmem [#allocation15], %s885
        // Predicated region
        $region73: #{tpu_custom_call.1} parent=39 // pred_check
          %p887 = pneg %p184
        $region74: #{tpu_custom_call.1} parent=39 // pred_check_branch
          %889 = sbr.rel (%p887) target = $region76
        $region75: #{tpu_custom_call.1} parent=39 // pred_region
          %891 = vsyncadd %s883, 0
          %s892 = sadd.s32 %s32, %s31
          %s893 = smul.addr %s892, 8
          %s894 = scalar_lea.hbm %s5, %s893
          %s896 = sshll.u32 %s886, 4
          %s897 = int_to_ptr.vmem [resolvable:$true] %s896
          %s898 = sshll.u32 %s894, 4
          %s899 = int_to_ptr.hbm [resolvable:$true] %s898
          %901 = dma.vmem_to_hbm [thread:$0]  %s897, 128, %s899, %s883
        $region76: #{tpu_custom_call.1} parent=39 // pred_fallthru
          _
      $region40: #{tpu_custom_call.1} parent=5 // pred_fallthru
        _
      %p902 = scmp.le.s32.totalorder 2, %s21
      // Predicated region
      $region77: #{tpu_custom_call.1} parent=5 // pred_check
        %p903 = pneg %p902
      $region78: #{tpu_custom_call.1} parent=5 // pred_check_branch
        %905 = sbr.rel (%p903) target = $region80
      $region79: #{tpu_custom_call.1} parent=5 // pred_region
        %s906 = ssub.s32 %s21, 2
        // Predicated region
        $region81: #{tpu_custom_call.1} parent=79 // pred_check
          %p907 = pneg %p190
        $region82: #{tpu_custom_call.1} parent=79 // pred_check_branch
          %909 = sbr.rel (%p907) target = $region84
        $region83: #{tpu_custom_call.1} parent=79 // pred_region
          %s910 = sand.u32 %s175, 1
          %s911 = scalar_lea.sflag [#allocation8], %s910
          %s912 = sand.u32 %s175, 1
          %s913 = smul.addr %s912, 8
          %s914 = scalar_lea.vmem [#allocation15], %s913
          %916 = dma.done %s911, 128
        $region84: #{tpu_custom_call.1} parent=79 // pred_fallthru
          _
      $region80: #{tpu_custom_call.1} parent=5 // pred_fallthru
        _
    $region6: #{tpu_custom_call.1} parent=1 // loop_footer
      %s25 = sadd.s32 1, %s21
    $region7: #{tpu_custom_call.1} parent=1 // loop_footer_branch
      %20 = sbr.rel target = $region3
    $region8: #{tpu_custom_call.1} parent=1 // loop_exit
      _
    %917 = vsyncpa [#allocation7], 1
    %s918 = scalar_lea.sflag [#allocation7], 1
    %919 = vsyncpa %s918, 1
    %920 = vsyncpa [#allocation10], 1
    %s921 = scalar_lea.sflag [#allocation10], 1
    %922 = vsyncpa %s921, 1
    %923 = vsyncpa [#allocation13], 1
    %924 = vsyncpa [#allocation8], 1
    %s925 = scalar_lea.sflag [#allocation8], 1
    %926 = vsyncpa %s925, 1

</llo_original>
